<compile_context>
chip_gen: v6e
topology: v6e:2x2x1
jax: 0.10.0
libtpu: 0.0.40
codegen_flags: <defaults>
</compile_context>

<pallas_src>
import jax
import jax.numpy as jnp
from jax import lax
from jax.experimental import pallas as pl
from jax.experimental.pallas import tpu as pltpu

# dot_general dims: contract the last axis of both operands (A @ B^T).
_TRANS_B = (((1,), (1,)), ((), ()))

_VMEM_LIMIT = 32 * 1024 * 1024   # safe on v5e / v6e / v7x


def _round_up(a, b):
    return (a + b - 1) // b * b


# ---------------------------------------------------------------------------
# outer == False:  score[n] = sum_ij x[n,i] W[i,j] y[n,j] + b
# ---------------------------------------------------------------------------
def _bilinear_kernel(x_ref, y_ref, w_ref, g_ref, b_ref, out_ref):
    """Packed bilinear tile.

    x_ref, y_ref : (tile_r, L)   `pack` original rows per packed row, L = pack*d
    w_ref        : (L, L)        block-diagonal kron(I_pack, W)
    g_ref        : (pack, L) f32 group indicator, G[g, g*d:(g+1)*d] = 1
    b_ref        : (1,) f32      bias scalar in SMEM
    out_ref      : (pack, tile_r) f32, lane-dense; [g, r] = score[r*pack + g]
    """
    t = jnp.dot(x_ref[...], w_ref[...],
                preferred_element_type=jnp.float32)                 # MXU
    z = t * y_ref[...].astype(jnp.float32)                          # VPU
    s = lax.dot_general(g_ref[...], z, _TRANS_B,
                        preferred_element_type=jnp.float32)         # MXU, lane-dense
    out_ref[...] = s + b_ref[0]


def bilinear_forward(x, y, w, b, *, tile_rows=None):
    """score = squeeze(nn.Bilinear(dim, dim, 1)(x, y), -1) -> [N] float32.

    x, y : [N, dim] (float32 or bfloat16)
    w    : [dim, dim]    (nn.Bilinear weight[0])
    b    : [1] / scalar  (nn.Bilinear bias)
    """
    M, d = x.shape
    assert y.shape == (M, d), (x.shape, y.shape)
    w32 = jnp.asarray(w, jnp.float32)
    b_arr = jnp.asarray(b, jnp.float32).reshape(1)

    # Pack `pack` feature rows side-by-side on the 128 lanes.
    pack = 128 // d if (d <= 64 and 128 % d == 0) else 1
    main = (M // pack) * pack            # rows handled by the Pallas kernel
    parts = []

    if main > 0:
        rows = main // pack
        L = pack * d
        # Row-major (main, d) == (rows, pack*d) bit-for-bit: free reshapes.
        xr = x[:main].reshape(rows, L)
        yr = y[:main].reshape(rows, L)

        in_dt = jnp.bfloat16 if x.dtype == jnp.bfloat16 else jnp.float32
        eye = jnp.eye(pack, dtype=jnp.float32)
        w_blk = jnp.kron(eye, w32).astype(in_dt)                    # (L, L), once
        g_mat = jnp.kron(eye, jnp.ones((1, d), jnp.float32))        # (pack, L)

        # Tile over packed rows: full extent for small inputs, otherwise a
        # multiple of 128 (lane-dense output stores, (8,128)-legal) chosen so
        # the grid has >= 2 steps (v7x: both TensorCores busy) and input
        # blocks stay ~1 MiB.
        cap = 2048 if tile_rows is None else max(128, (int(tile_rows) // 128) * 128)
        if rows <= 256:
            tile_r = rows
        else:
            tile_r = min(cap, _round_up(pl.cdiv(rows, 2), 128))
        grid = (pl.cdiv(rows, tile_r),)

        itemsize = jnp.dtype(x.dtype).itemsize
        cost = pl.CostEstimate(
            flops=2 * rows * L * L + rows * L + 2 * rows * pack * L,
            transcendentals=0,
            bytes_accessed=(2 * rows * L * itemsize
                            + 4 * (L * L + pack * L + pack * rows + 1)))

        out2d = pl.pallas_call(
            _bilinear_kernel,
            out_shape=jax.ShapeDtypeStruct((pack, rows), jnp.float32),
            grid_spec=pltpu.PrefetchScalarGridSpec(
                num_scalar_prefetch=0,
                grid=grid,
                in_specs=[
                    pl.BlockSpec((tile_r, L), lambda i: (i, 0)),        # x tile
                    pl.BlockSpec((tile_r, L), lambda i: (i, 0)),        # y tile
                    pl.BlockSpec((L, L), lambda i: (0, 0)),             # kron(I,W), resident
                    pl.BlockSpec((pack, L), lambda i: (0, 0)),          # G, resident
                    pl.BlockSpec(memory_space=pltpu.MemorySpace.SMEM),  # bias scalar
                ],
                out_specs=pl.BlockSpec((pack, tile_r), lambda i: (0, i)),  # lane-dense
            ),
            compiler_params=pltpu.CompilerParams(
                dimension_semantics=("parallel",),
                vmem_limit_bytes=_VMEM_LIMIT),
            cost_estimate=cost,
        )(xr, yr, w_blk, g_mat, b_arr)

        # out2d[g, r] = score[r*pack + g]  ->  row-major [main] order.
        parts.append(out2d.T.reshape(main))

    if main < M:
        # < pack leftover rows: trivial, do them in plain JAX (avoids a
        # full-array jnp.pad, which would double HBM traffic).
        xt = x[main:].astype(jnp.float32)
        yt = y[main:].astype(jnp.float32)
        parts.append(jnp.sum((xt @ w32) * yt, axis=1) + b_arr[0])

    return parts[0] if len(parts) == 1 else jnp.concatenate(parts, axis=0)


# ---------------------------------------------------------------------------
# outer == True:  score = (x @ W) @ y.T  ==  x @ (y @ W.T).T
# ---------------------------------------------------------------------------
def _outer_kernel(x_ref, yw_ref, out_ref):
    out_ref[...] = lax.dot_general(
        x_ref[...], yw_ref[...], _TRANS_B,
        preferred_element_type=jnp.float32).astype(out_ref.dtype)


def bilinear_outer_forward(x, y, w, *, tile_m=None, tile_n=None):
    """score = (x @ w) @ y.T -> [Nx, Ny] float32."""
    mx, d = x.shape
    ny, d2 = y.shape
    assert d == d2, (x.shape, y.shape)

    # Fold W into y once (tiny XLA matmul): kernel becomes a single A @ B^T,
    # no W residency and half the MXU pushes per tile.
    yw = jnp.matmul(y.astype(jnp.float32),
                    jnp.asarray(w, jnp.float32).T).astype(x.dtype)

    # Row tile (multiple of 8 / full) and column tile (multiple of 128 / full).
    if tile_m is None:
        tm = mx if mx <= 256 else 256
    else:
        tm = int(tile_m)
        tm = mx if tm >= mx else max(8, (tm // 8) * 8)
    if tile_n is None:
        tn = ny if ny <= 512 else 512
    else:
        tn = int(tile_n)
        tn = ny if tn >= ny else max(128, (tn // 128) * 128)
        if tn >= ny:
            tn = ny

    grid = (pl.cdiv(mx, tm), pl.cdiv(ny, tn))
    itemsize = jnp.dtype(x.dtype).itemsize

    return pl.pallas_call(
        _outer_kernel,
        out_shape=jax.ShapeDtypeStruct((mx, ny), jnp.float32),
        grid_spec=pltpu.PrefetchScalarGridSpec(
            num_scalar_prefetch=0,
            grid=grid,
            in_specs=[
                pl.BlockSpec((tm, d), lambda i, j: (i, 0)),   # x row tile
                pl.BlockSpec((tn, d), lambda i, j: (j, 0)),   # (y @ W.T) col tile
            ],
            out_specs=pl.BlockSpec((tm, tn), lambda i, j: (i, j)),
        ),
        compiler_params=pltpu.CompilerParams(
            dimension_semantics=("parallel", "parallel"),
            vmem_limit_bytes=_VMEM_LIMIT),
        cost_estimate=pl.CostEstimate(
            flops=2 * mx * ny * d,
            transcendentals=0,
            bytes_accessed=(mx * d + ny * d) * itemsize + 4 * mx * ny),
    )(x, yw)


if __name__ == "__main__":
    # Module config: Bilinear(dim=16, mlp_dim=...) -> nn.Bilinear(16, 16, 1)
    dim = 16
    batch = 4096          # packed rows = 512 -> 2-step pipelined parallel grid

    key = jax.random.PRNGKey(0)
    kx, ky, kw, kb, kwo = jax.random.split(key, 5)

    x = jax.random.normal(kx, (batch, dim), dtype=jnp.float32)
    y = jax.random.normal(ky, (batch, dim), dtype=jnp.float32)

    scale = 1.0 / jnp.sqrt(jnp.float32(dim))
    w_bil = jax.random.uniform(kw, (dim, dim), jnp.float32, -scale, scale)
    b_bil = jax.random.uniform(kb, (1,), jnp.float32, -scale, scale)
    w_out = jax.random.normal(kwo, (dim, dim), dtype=jnp.float32) * scale  # glorot-ish

    hp = jax.lax.Precision.HIGHEST
    ref = jnp.sum(jnp.matmul(x, w_bil, precision=hp) * y, axis=1) + b_bil[0]

    # --- outer=False (default) path, f32 ---------------------------------
    score = jax.block_until_ready(bilinear_forward(x, y, w_bil, b_bil))
    assert score.shape == (batch,), score.shape
    assert jnp.allclose(score, ref, atol=3e-3, rtol=3e-3), (
        float(jnp.max(jnp.abs(score - ref))))

    # --- ragged batch (pack tail + clipped last grid block, no jnp.pad) ---
    mr = 3999
    score_r = jax.block_until_ready(bilinear_forward(x[:mr], y[:mr], w_bil, b_bil))
    assert score_r.shape == (mr,), score_r.shape
    assert jnp.allclose(score_r, ref[:mr], atol=3e-3, rtol=3e-3), (
        float(jnp.max(jnp.abs(score_r - ref[:mr]))))

    # --- bf16 operands (half the HBM traffic) ------------------------------
    score_bf = jax.block_until_ready(
        bilinear_forward(x.astype(jnp.bfloat16), y.astype(jnp.bfloat16),
                         w_bil, b_bil))
    assert score_bf.shape == (batch,), score_bf.shape
    assert jnp.allclose(score_bf, ref, atol=1.5e-1, rtol=5e-2), (
        float(jnp.max(jnp.abs(score_bf - ref))))

    # --- outer=True path ----------------------------------------------------
    xo, yo = x[:512], y[:512]
    score_outer = jax.block_until_ready(bilinear_outer_forward(xo, yo, w_out))
    ref_outer = jnp.matmul(jnp.matmul(xo, w_out, precision=hp), yo.T, precision=hp)
    assert score_outer.shape == (512, 512), score_outer.shape
    assert jnp.allclose(score_outer, ref_outer, atol=3e-3, rtol=3e-3), (
        float(jnp.max(jnp.abs(score_outer - ref_outer))))

    print("KERNEL_OK")
</pallas_src>

<mosaic_0001>
module attributes {stable_mosaic.version = 11 : i64} {
  func.func @_bilinear_kernel(%arg0: i32, %arg1: memref<256x128xf32, #tpu.memory_space<vmem>>, %arg2: memref<256x128xf32, #tpu.memory_space<vmem>>, %arg3: memref<128x128xf32, #tpu.memory_space<vmem>>, %arg4: memref<8x128xf32, #tpu.memory_space<vmem>>, %arg5: memref<1xf32, #tpu.memory_space<smem>>, %arg6: memref<8x256xf32, #tpu.memory_space<vmem>>) attributes {dimension_semantics = [#tpu.dimension_semantics<parallel>], iteration_bounds = array<i64: 2>, scalar_prefetch = 0 : i64, scratch_operands = 0 : i64, tpu.core_type = #tpu.core_type<tc>, window_params = [{transform_indices = @transform_0, window_bounds = array<i64: 256, 128>}, {transform_indices = @transform_1, window_bounds = array<i64: 256, 128>}, {pipeline_mode = #tpu.pipeline_mode<synchronous>, transform_indices = @transform_2, window_bounds = array<i64: 128, 128>}, {pipeline_mode = #tpu.pipeline_mode<synchronous>, transform_indices = @transform_3, window_bounds = array<i64: 8, 128>}, {transform_indices = @transform_4, window_bounds = array<i64: 1>}, {transform_indices = @transform_5, window_bounds = array<i64: 8, 256>}]} {
    %c0 = arith.constant 0 : index
    %c0_0 = arith.constant 0 : index
    %0 = vector.load %arg1[%c0, %c0_0] : memref<256x128xf32, #tpu.memory_space<vmem>>, vector<256x128xf32>
    %c0_1 = arith.constant 0 : index
    %c0_2 = arith.constant 0 : index
    %1 = vector.load %arg3[%c0_1, %c0_2] : memref<128x128xf32, #tpu.memory_space<vmem>>, vector<128x128xf32>
    %cst = arith.constant dense<0.000000e+00> : vector<256x128xf32>
    %2 = tpu.matmul %0, %1, %cst {dimension_numbers = #tpu.dot_dimension_numbers<[1], [0], [0], [1], [0, 0, 1, 1], [], []>} : vector<256x128xf32>, vector<128x128xf32>, vector<256x128xf32> -> vector<256x128xf32>
    %c0_3 = arith.constant 0 : index
    %c0_4 = arith.constant 0 : index
    %3 = vector.load %arg2[%c0_3, %c0_4] : memref<256x128xf32, #tpu.memory_space<vmem>>, vector<256x128xf32>
    %4 = arith.mulf %2, %3 : vector<256x128xf32>
    %c0_5 = arith.constant 0 : index
    %c0_6 = arith.constant 0 : index
    %5 = vector.load %arg4[%c0_5, %c0_6] : memref<8x128xf32, #tpu.memory_space<vmem>>, vector<8x128xf32>
    %cst_7 = arith.constant dense<0.000000e+00> : vector<8x256xf32>
    %6 = tpu.matmul %5, %4, %cst_7 {dimension_numbers = #tpu.dot_dimension_numbers<[1], [1], [0], [0], [0, 0, 1, 0], [], []>} : vector<8x128xf32>, vector<256x128xf32>, vector<8x256xf32> -> vector<8x256xf32>
    %c0_8 = arith.constant 0 : index
    %7 = memref.load %arg5[%c0_8] : memref<1xf32, #tpu.memory_space<smem>>
    %8 = vector.broadcast %7 : f32 to vector<8x256xf32>
    %9 = arith.addf %6, %8 : vector<8x256xf32>
    %c0_9 = arith.constant 0 : index
    %c0_10 = arith.constant 0 : index
    %10 = vector.load %arg6[%c0_9, %c0_10] : memref<8x256xf32, #tpu.memory_space<vmem>>, vector<8x256xf32>
    tpu.vector_store %arg6[%c0_9, %c0_10], %9 {strides = array<i32>} : memref<8x256xf32, #tpu.memory_space<vmem>>, vector<8x256xf32>,
    return
  }
  func.func @transform_0(%arg0: i32) -> (i32, i32) {
    %c0_i32 = arith.constant 0 : i32
    %c0_i32_0 = arith.constant 0 : i32
    return %arg0, %c0_i32 : i32, i32
  }
  func.func @transform_1(%arg0: i32) -> (i32, i32) {
    %c0_i32 = arith.constant 0 : i32
    %c0_i32_0 = arith.constant 0 : i32
    return %arg0, %c0_i32 : i32, i32
  }
  func.func @transform_2(%arg0: i32) -> (i32, i32) {
    %c0_i32 = arith.constant 0 : i32
    %c0_i32_0 = arith.constant 0 : i32
    %c0_i32_1 = arith.constant 0 : i32
    return %c0_i32, %c0_i32_0 : i32, i32
  }
  func.func @transform_3(%arg0: i32) -> (i32, i32) {
    %c0_i32 = arith.constant 0 : i32
    %c0_i32_0 = arith.constant 0 : i32
    %c0_i32_1 = arith.constant 0 : i32
    return %c0_i32, %c0_i32_0 : i32, i32
  }
  func.func @transform_4(%arg0: i32) -> i32 {
    %c0_i32 = arith.constant 0 : i32
    %c0_i32_0 = arith.constant 0 : i32
    return %c0_i32 : i32
  }
  func.func @transform_5(%arg0: i32) -> (i32, i32) {
    %c0_i32 = arith.constant 0 : i32
    %c0_i32_0 = arith.constant 0 : i32
    return %c0_i32, %arg0 : i32, i32
  }
}

</mosaic_0001>

<llo_original>
// kernel: tpu_custom_call.1
$region0: #{tpu_custom_call.1}
  #allocation0 [shape = 'u32[]', space=smem, size = 0x4, offset = 0x4, fixed_abs, tag = 'smem constant byte address 0x4 - core index']
  #allocation1 [shape = 'u32[144,128]{1,0:T(1,128)}', space=vmem, size = 0x12000, scoped, tag = 'internal scratch']
  #allocation2 [shape = 'f32[1]{0:T(128)S(6)}', space=smem, size = 0x200, scoped, tag = 'scoped memory for tpu_custom_call.1']
  %s0 = inlined_call_operand.hbm [shape: f32[512,128], index: 0, kind: input, shape index: {}]
  %s1 = inlined_call_operand.hbm [shape: f32[512,128], index: 1, kind: input, shape index: {}]
  %s2 = inlined_call_operand.hbm [shape: f32[128,128], index: 2, kind: input, shape index: {}]
  %s3 = inlined_call_operand.hbm [shape: f32[8,128], index: 3, kind: input, shape index: {}]
  %s4 = inlined_call_operand.<no memory space> [shape: f32[1], index: 4, kind: input, shape index: {}]
  %s5 = inlined_call_operand.hbm [shape: f32[8,512], index: 5, kind: output, shape index: {}]
  %s6 = sld [smem:[#allocation0]]
  $region69: #{tpu_custom_call.1} parent=0
    _
  %s8 = ssub.s32 1, %s6
  %s9 = scalar_select 0, %s8, %s6
  %10 = sst [smem:[#allocation2]] %s4
  $region1: #{tpu_custom_call.1} parent=0
    #allocation3 [shape = 'u8[262144]{0}', space=vmem, size = 0x40000, scoped, tag = 'input window, operand 0']
    #allocation4 [shape = 's32[2]{0}', space=sflag, size = 0x8, scoped, tag = 'scoped memory for tpu_custom_call.1']
    #allocation5 [shape = 's32[2]{0}', space=sflag, size = 0x8, scoped, tag = 'scoped memory for tpu_custom_call.1']
    #allocation6 [shape = 'u8[262144]{0}', space=vmem, size = 0x40000, scoped, tag = 'input window, operand 1']
    #allocation7 [shape = 's32[2]{0}', space=sflag, size = 0x8, scoped, tag = 'scoped memory for tpu_custom_call.1']
    #allocation8 [shape = 'u8[65536]{0}', space=vmem, size = 0x10000, scoped, tag = 'input window, operand 2, single buffered']
    #allocation9 [shape = 'u8[4096]{0}', space=vmem, size = 0x1000, scoped, tag = 'input window, operand 3, single buffered']
    #allocation10 [shape = 's32[1]{0}', space=sflag, size = 0x4, scoped, tag = 'scoped memory for tpu_custom_call.1']
    #allocation11 [shape = 'u8[16384]{0}', space=vmem, size = 0x4000, scoped, tag = 'output window, operand 0']
    %11 = vsyncpa [#allocation4], 0
    %s12 = scalar_lea.sflag [#allocation4], 1
    %13 = vsyncpa %s12, 0
    %14 = vsyncpa [#allocation7], 0
    %s15 = scalar_lea.sflag [#allocation7], 1
    %16 = vsyncpa %s15, 0
    %17 = vsyncpa [#allocation10], 0
    %18 = vsyncpa [#allocation5], 0
    %s19 = scalar_lea.sflag [#allocation5], 1
    %20 = vsyncpa %s19, 0
    loop: start=0, step=1, limit=4
    $region2: #{tpu_custom_call.1} parent=1 // loop_pre_header
      _
    $region3: #{tpu_custom_call.1} parent=1 // loop_header
      %s22 = sphi 0, %s26
      %p23 = scmp.ge.s32.totalorder %s22, 4
      %s32 = sphi 0, %s34
      %s35 = sphi 0, %s32
      %s36 = sphi 0, %s35
      %s52 = sphi 0, %s36
      %s58 = sphi 0, %s60
      %s61 = sphi 0, %s58
      %s62 = sphi 0, %s61
      %s78 = sphi 0, %s62
      %s82 = sphi 0, %s82
      %s84 = sphi 0, %s82
      %s85 = sphi 0, %s84
      %s99 = sphi 0, %s85
      %s103 = sphi 0, %s103
      %s105 = sphi 0, %s103
      %s106 = sphi 0, %s105
      %s120 = sphi 0, %s106
      %s124 = sphi 0, %s124
      %s126 = sphi 0, %s124
      %s127 = sphi 0, %s126
      %s141 = sphi 0, %s127
      %s147 = sphi 0, %s149
      %s150 = sphi 0, %s147
      %s151 = sphi 0, %s150
      %s167 = sphi 0, %s151
    $region4: #{tpu_custom_call.1} parent=1 // loop_header_branch
      %25 = sbr.rel (%p23) target = $region8
    $region5: #{tpu_custom_call.1} parent=1 // loop_body
      %s27 = ssub.s32 %s22, 1
      %s28 = ssub.s32 %s22, 2
      %s29 = sadd.s32 %s22, 1
      %s30 = ssub.s32 %s22, %s29
      %p31 = scmp.eq.s32.totalorder %s30, 0
      %s33 = sadd.s32 %s32, 1
      %s34 = scalar_select %p31, %s32, %s33
      %p37 = pneg %p31
      %p38 = scmp.eq.s32.totalorder %s22, 1
      %p39 = por %p37, %p38
      %p40 = scmp.ne.s32.totalorder %s32, %s35
      %p41 = scmp.eq.s32.totalorder %s22, 0
      %p42 = por %p40, %p41
      %p43 = scmp.ne.s32.totalorder %s32, %s35
      %p44 = scmp.eq.s32.totalorder %s27, 1
      %p45 = por %p43, %p44
      %p46 = scmp.ne.s32.totalorder %s35, %s36
      %p47 = scmp.eq.s32.totalorder %s27, 0
      %p48 = por %p46, %p47
      %p49 = scmp.ne.s32.totalorder %s35, %s36
      %p50 = scmp.eq.s32.totalorder %s28, 1
      %p51 = por %p49, %p50
      %p53 = scmp.ne.s32.totalorder %s36, %s52
      %p54 = scmp.eq.s32.totalorder %s28, 0
      %p55 = por %p53, %p54
      %s56 = ssub.s32 %s22, %s29
      %p57 = scmp.eq.s32.totalorder %s56, 0
      %s59 = sadd.s32 %s58, 1
      %s60 = scalar_select %p57, %s58, %s59
      %p63 = pneg %p57
      %p64 = scmp.eq.s32.totalorder %s22, 1
      %p65 = por %p63, %p64
      %p66 = scmp.ne.s32.totalorder %s58, %s61
      %p67 = scmp.eq.s32.totalorder %s22, 0
      %p68 = por %p66, %p67
      %p69 = scmp.ne.s32.totalorder %s58, %s61
      %p70 = scmp.eq.s32.totalorder %s27, 1
      %p71 = por %p69, %p70
      %p72 = scmp.ne.s32.totalorder %s61, %s62
      %p73 = scmp.eq.s32.totalorder %s27, 0
      %p74 = por %p72, %p73
      %p75 = scmp.ne.s32.totalorder %s61, %s62
      %p76 = scmp.eq.s32.totalorder %s28, 1
      %p77 = por %p75, %p76
      %p79 = scmp.ne.s32.totalorder %s62, %s78
      %p80 = scmp.eq.s32.totalorder %s28, 0
      %p81 = por %p79, %p80
      %s83 = sadd.s32 %s82, 1
      %p86 = scmp.eq.s32.totalorder %s22, 1
      %p87 = scmp.ne.s32.totalorder %s82, %s84
      %p88 = scmp.eq.s32.totalorder %s22, 0
      %p89 = por %p87, %p88
      %p90 = scmp.ne.s32.totalorder %s82, %s84
      %p91 = scmp.eq.s32.totalorder %s27, 1
      %p92 = por %p90, %p91
      %p93 = scmp.ne.s32.totalorder %s84, %s85
      %p94 = scmp.eq.s32.totalorder %s27, 0
      %p95 = por %p93, %p94
      %p96 = scmp.ne.s32.totalorder %s84, %s85
      %p97 = scmp.eq.s32.totalorder %s28, 1
      %p98 = por %p96, %p97
      %p100 = scmp.ne.s32.totalorder %s85, %s99
      %p101 = scmp.eq.s32.totalorder %s28, 0
      %p102 = por %p100, %p101
      %s104 = sadd.s32 %s103, 1
      %p107 = scmp.eq.s32.totalorder %s22, 1
      %p108 = scmp.ne.s32.totalorder %s103, %s105
      %p109 = scmp.eq.s32.totalorder %s22, 0
      %p110 = por %p108, %p109
      %p111 = scmp.ne.s32.totalorder %s103, %s105
      %p112 = scmp.eq.s32.totalorder %s27, 1
      %p113 = por %p111, %p112
      %p114 = scmp.ne.s32.totalorder %s105, %s106
      %p115 = scmp.eq.s32.totalorder %s27, 0
      %p116 = por %p114, %p115
      %p117 = scmp.ne.s32.totalorder %s105, %s106
      %p118 = scmp.eq.s32.totalorder %s28, 1
      %p119 = por %p117, %p118
      %p121 = scmp.ne.s32.totalorder %s106, %s120
      %p122 = scmp.eq.s32.totalorder %s28, 0
      %p123 = por %p121, %p122
      %s125 = sadd.s32 %s124, 1
      %p128 = scmp.eq.s32.totalorder %s22, 1
      %p129 = scmp.ne.s32.totalorder %s124, %s126
      %p130 = scmp.eq.s32.totalorder %s22, 0
      %p131 = por %p129, %p130
      %p132 = scmp.ne.s32.totalorder %s124, %s126
      %p133 = scmp.eq.s32.totalorder %s27, 1
      %p134 = por %p132, %p133
      %p135 = scmp.ne.s32.totalorder %s126, %s127
      %p136 = scmp.eq.s32.totalorder %s27, 0
      %p137 = por %p135, %p136
      %p138 = scmp.ne.s32.totalorder %s126, %s127
      %p139 = scmp.eq.s32.totalorder %s28, 1
      %p140 = por %p138, %p139
      %p142 = scmp.ne.s32.totalorder %s127, %s141
      %p143 = scmp.eq.s32.totalorder %s28, 0
      %p144 = por %p142, %p143
      %s145 = ssub.s32 %s22, %s29
      %p146 = scmp.eq.s32.totalorder %s145, 0
      %s148 = sadd.s32 %s147, 1
      %s149 = scalar_select %p146, %s147, %s148
      %p152 = pneg %p146
      %p153 = scmp.eq.s32.totalorder %s22, 1
      %p154 = por %p152, %p153
      %p155 = scmp.ne.s32.totalorder %s147, %s150
      %p156 = scmp.eq.s32.totalorder %s22, 0
      %p157 = por %p155, %p156
      %p158 = scmp.ne.s32.totalorder %s147, %s150
      %p159 = scmp.eq.s32.totalorder %s27, 1
      %p160 = por %p158, %p159
      %p161 = scmp.ne.s32.totalorder %s150, %s151
      %p162 = scmp.eq.s32.totalorder %s27, 0
      %p163 = por %p161, %p162
      %p164 = scmp.ne.s32.totalorder %s150, %s151
      %p165 = scmp.eq.s32.totalorder %s28, 1
      %p166 = por %p164, %p165
      %p168 = scmp.ne.s32.totalorder %s151, %s167
      %p169 = scmp.eq.s32.totalorder %s28, 0
      %p170 = por %p168, %p169
      %p171 = scmp.le.s32.totalorder 1, %s22
      %p172 = scmp.lt.s32.totalorder %s22, 3
      %p173 = pnand %p171, %p172
      %p174 = pneg %p173
      // Predicated region
      $region9: #{tpu_custom_call.1} parent=5 // pred_check
        _
      $region10: #{tpu_custom_call.1} parent=5 // pred_check_branch
        %176 = sbr.rel (%p173) target = $region12
      $region11: #{tpu_custom_call.1} parent=5 // pred_region
        %s177 = ssub.s32 %s22, 1
        // Predicated region
        $region13: #{tpu_custom_call.1} parent=11 // pred_check
          %p178 = pneg %p95
        $region14: #{tpu_custom_call.1} parent=11 // pred_check_branch
          %180 = sbr.rel (%p178) target = $region16
        $region15: #{tpu_custom_call.1} parent=11 // pred_region
          %s182 = ssub.s32 2048, 2048
          %183 = vsyncadd [#allocation7], %s182
          %s184 = sshll.u32 [#allocation8], 4
          %s185 = int_to_ptr.vmem [resolvable:$true] %s184
          %190 = dma.hbm_to_vmem [thread:$0]  %s2, 2048, %s185, [#allocation7], 128, 128, 8
        $region16: #{tpu_custom_call.1} parent=11 // pred_fallthru
          _
        // Predicated region
        $region17: #{tpu_custom_call.1} parent=11 // pred_check
          %p191 = pneg %p116
        $region18: #{tpu_custom_call.1} parent=11 // pred_check_branch
          %193 = sbr.rel (%p191) target = $region20
        $region19: #{tpu_custom_call.1} parent=11 // pred_region
          %s195 = ssub.s32 128, 128
          %196 = vsyncadd [#allocation10], %s195
          %s198 = sshll.u32 [#allocation9], 4
          %s199 = int_to_ptr.vmem [resolvable:$true] %s198
          %201 = dma.hbm_to_vmem [thread:$0]  %s3, 128, %s199, [#allocation10]
        $region20: #{tpu_custom_call.1} parent=11 // pred_fallthru
          _
        // Predicated region
        $region21: #{tpu_custom_call.1} parent=11 // pred_check
          %p202 = pneg %p137
        $region22: #{tpu_custom_call.1} parent=11 // pred_check_branch
          %204 = sbr.rel (%p202) target = $region24
        $region23: #{tpu_custom_call.1} parent=11 // pred_region
          _
        $region24: #{tpu_custom_call.1} parent=11 // pred_fallthru
          _
      $region12: #{tpu_custom_call.1} parent=5 // pred_fallthru
        _
      %p205 = scmp.lt.s32.totalorder %s22, 2
      // Predicated region
      $region25: #{tpu_custom_call.1} parent=5 // pred_check
        %p206 = pneg %p205
      $region26: #{tpu_custom_call.1} parent=5 // pred_check_branch
        %208 = sbr.rel (%p206) target = $region28
      $region27: #{tpu_custom_call.1} parent=5 // pred_region
        // Predicated region
        $region29: #{tpu_custom_call.1} parent=27 // pred_check
          %p209 = pneg %p42
        $region30: #{tpu_custom_call.1} parent=27 // pred_check_branch
          %211 = sbr.rel (%p209) target = $region32
        $region31: #{tpu_custom_call.1} parent=27 // pred_region
          %s212 = sand.u32 %s32, 1
          %s213 = scalar_lea.sflag [#allocation4], %s212
          %s214 = sand.u32 %s32, 1
          %s215 = smul.addr %s214, 256
          %s216 = scalar_lea.vmem [#allocation3], %s215
          %s217 = smul.u32 32, %s22
          %s219 = ssub.s32 4096, 4096
          %220 = vsyncadd %s213, %s219
          %s221 = smul.addr %s217, 128
          %s222 = scalar_lea.hbm %s0, %s221
          %s223 = sshll.u32 %s216, 4
          %s224 = int_to_ptr.vmem [resolvable:$true] %s223
          %229 = dma.hbm_to_vmem [thread:$0]  %s222, 4096, %s224, %s213, 128, 128, 8
        $region32: #{tpu_custom_call.1} parent=27 // pred_fallthru
          _
        // Predicated region
        $region33: #{tpu_custom_call.1} parent=27 // pred_check
          %p230 = pneg %p68
        $region34: #{tpu_custom_call.1} parent=27 // pred_check_branch
          %232 = sbr.rel (%p230) target = $region36
        $region35: #{tpu_custom_call.1} parent=27 // pred_region
          %s233 = sand.u32 %s22, 1
          %s234 = scalar_lea.sflag [#allocation7], %s233
          %s235 = sand.u32 %s58, 1
          %s236 = smul.addr %s235, 256
          %s237 = scalar_lea.vmem [#allocation6], %s236
          %s238 = smul.u32 32, %s22
          %s240 = ssub.s32 4096, 4096
          %241 = vsyncadd %s234, %s240
          %s242 = smul.addr %s238, 128
          %s243 = scalar_lea.hbm %s1, %s242
          %s244 = sshll.u32 %s237, 4
          %s245 = int_to_ptr.vmem [resolvable:$true] %s244
          %250 = dma.hbm_to_vmem [thread:$0]  %s243, 4096, %s245, %s234, 128, 128, 8
        $region36: #{tpu_custom_call.1} parent=27 // pred_fallthru
          _
      $region28: #{tpu_custom_call.1} parent=5 // pred_fallthru
        _
      %p251 = scmp.le.s32.totalorder 1, %s22
      %p252 = scmp.lt.s32.totalorder %s22, 3
      %p253 = pnand %p251, %p252
      %p254 = pneg %p253
      // Predicated region
      $region37: #{tpu_custom_call.1} parent=5 // pred_check
        _
      $region38: #{tpu_custom_call.1} parent=5 // pred_check_branch
        %256 = sbr.rel (%p253) target = $region40
      $region39: #{tpu_custom_call.1} parent=5 // pred_region
        %s257 = ssub.s32 %s22, 1
        %s258 = sand.u32 %s35, 1
        %s259 = scalar_lea.sflag [#allocation4], %s258
        %s260 = sand.u32 %s35, 1
        %s261 = smul.addr %s260, 256
        %s262 = scalar_lea.vmem [#allocation3], %s261
        // Predicated region
        $region41: #{tpu_custom_call.1} parent=39 // pred_check
          %p263 = pneg %p48
        $region42: #{tpu_custom_call.1} parent=39 // pred_check_branch
          %265 = sbr.rel (%p263) target = $region44
        $region43: #{tpu_custom_call.1} parent=39 // pred_region
          %266 = dma.done %s259, 4096
        $region44: #{tpu_custom_call.1} parent=39 // pred_fallthru
          _
        %s267 = sand.u32 %s27, 1
        %s268 = scalar_lea.sflag [#allocation7], %s267
        %s269 = sand.u32 %s61, 1
        %s270 = smul.addr %s269, 256
        %s271 = scalar_lea.vmem [#allocation6], %s270
        // Predicated region
        $region45: #{tpu_custom_call.1} parent=39 // pred_check
          %p272 = pneg %p74
        $region46: #{tpu_custom_call.1} parent=39 // pred_check_branch
          %274 = sbr.rel (%p272) target = $region48
        $region47: #{tpu_custom_call.1} parent=39 // pred_region
          %275 = dma.done %s268, 4096
        $region48: #{tpu_custom_call.1} parent=39 // pred_fallthru
          _
        // Predicated region
        $region49: #{tpu_custom_call.1} parent=39 // pred_check
          %p276 = pneg %p95
        $region50: #{tpu_custom_call.1} parent=39 // pred_check_branch
          %278 = sbr.rel (%p276) target = $region52
        $region51: #{tpu_custom_call.1} parent=39 // pred_region
          %279 = dma.done [#allocation7], 2048
        $region52: #{tpu_custom_call.1} parent=39 // pred_fallthru
          _
        // Predicated region
        $region53: #{tpu_custom_call.1} parent=39 // pred_check
          %p280 = pneg %p116
        $region54: #{tpu_custom_call.1} parent=39 // pred_check_branch
          %282 = sbr.rel (%p280) target = $region56
        $region55: #{tpu_custom_call.1} parent=39 // pred_region
          %283 = dma.done [#allocation10], 128
        $region56: #{tpu_custom_call.1} parent=39 // pred_fallthru
          _
        %s284 = sand.u32 %s35, 1
        %s285 = scalar_lea.sflag [#allocation4], %s284
        %s286 = sand.u32 %s35, 1
        %s287 = smul.addr %s286, 256
        %s288 = scalar_lea.vmem [#allocation3], %s287
        %p289 = pneg %p48
        %p290 = pneg %p45
        %s291 = sand.u32 %s27, 1
        %s292 = scalar_lea.sflag [#allocation7], %s291
        %s293 = sand.u32 %s61, 1
        %s294 = smul.addr %s293, 256
        %s295 = scalar_lea.vmem [#allocation6], %s294
        %p296 = pneg %p74
        %p297 = pneg %p71
        %p298 = pneg %p95
        %p299 = pneg %p92
        %p300 = pneg %p116
        %p301 = pneg %p113
        %p302 = pneg %p137
        %p303 = pneg %p134
        %p304 = pneg %p163
        %p305 = pneg %p160
        %s306 = sand.u32 %s150, 1
        %s307 = scalar_lea.sflag [#allocation5], %s306
        %s308 = sand.u32 %s150, 1
        %s309 = smul.addr %s308, 16
        %s310 = scalar_lea.vmem [#allocation11], %s309
        %s311 = smul.u32 32, %s27
        %s312 = smul.u32 32, %s27
        %s313 = smul.u32 2, %s27
        %v314 = vld [vmem:[%s262] sm:$0xff]
        %v315 = vld [vmem:[%s262 + $0x8] sm:$0xff]
        %v316 = vld [vmem:[%s262 + $0x10] sm:$0xff]
        %v317 = vld [vmem:[%s262 + $0x18] sm:$0xff]
        %v318 = vld [vmem:[%s262 + $0x20] sm:$0xff]
        %v319 = vld [vmem:[%s262 + $0x28] sm:$0xff]
        %v320 = vld [vmem:[%s262 + $0x30] sm:$0xff]
        %v321 = vld [vmem:[%s262 + $0x38] sm:$0xff]
        %v322 = vld [vmem:[%s262 + $0x40] sm:$0xff]
        %v323 = vld [vmem:[%s262 + $0x48] sm:$0xff]
        %v324 = vld [vmem:[%s262 + $0x50] sm:$0xff]
        %v325 = vld [vmem:[%s262 + $0x58] sm:$0xff]
        %v326 = vld [vmem:[%s262 + $0x60] sm:$0xff]
        %v327 = vld [vmem:[%s262 + $0x68] sm:$0xff]
        %v328 = vld [vmem:[%s262 + $0x70] sm:$0xff]
        %v329 = vld [vmem:[%s262 + $0x78] sm:$0xff]
        %v330 = vld [vmem:[%s262 + $0x80] sm:$0xff]
        %v331 = vld [vmem:[%s262 + $0x88] sm:$0xff]
        %v332 = vld [vmem:[%s262 + $0x90] sm:$0xff]
        %v333 = vld [vmem:[%s262 + $0x98] sm:$0xff]
        %v334 = vld [vmem:[%s262 + $0xa0] sm:$0xff]
        %v335 = vld [vmem:[%s262 + $0xa8] sm:$0xff]
        %v336 = vld [vmem:[%s262 + $0xb0] sm:$0xff]
        %v337 = vld [vmem:[%s262 + $0xb8] sm:$0xff]
        %v338 = vld [vmem:[%s262 + $0xc0] sm:$0xff]
        %v339 = vld [vmem:[%s262 + $0xc8] sm:$0xff]
        %v340 = vld [vmem:[%s262 + $0xd0] sm:$0xff]
        %v341 = vld [vmem:[%s262 + $0xd8] sm:$0xff]
        %v342 = vld [vmem:[%s262 + $0xe0] sm:$0xff]
        %v343 = vld [vmem:[%s262 + $0xe8] sm:$0xff]
        %v344 = vld [vmem:[%s262 + $0xf0] sm:$0xff]
        %v345 = vld [vmem:[%s262 + $0xf8] sm:$0xff]
        %v346 = vld [vmem:[#allocation8] sm:$0xff]
        %v347 = vld [vmem:[#allocation8 + $0x8] sm:$0xff]
        %v348 = vld [vmem:[#allocation8 + $0x10] sm:$0xff]
        %v349 = vld [vmem:[#allocation8 + $0x18] sm:$0xff]
        %v350 = vld [vmem:[#allocation8 + $0x20] sm:$0xff]
        %v351 = vld [vmem:[#allocation8 + $0x28] sm:$0xff]
        %v352 = vld [vmem:[#allocation8 + $0x30] sm:$0xff]
        %v353 = vld [vmem:[#allocation8 + $0x38] sm:$0xff]
        %v354 = vld [vmem:[#allocation8 + $0x40] sm:$0xff]
        %v355 = vld [vmem:[#allocation8 + $0x48] sm:$0xff]
        %v356 = vld [vmem:[#allocation8 + $0x50] sm:$0xff]
        %v357 = vld [vmem:[#allocation8 + $0x58] sm:$0xff]
        %v358 = vld [vmem:[#allocation8 + $0x60] sm:$0xff]
        %v359 = vld [vmem:[#allocation8 + $0x68] sm:$0xff]
        %v360 = vld [vmem:[#allocation8 + $0x70] sm:$0xff]
        %v361 = vld [vmem:[#allocation8 + $0x78] sm:$0xff]
        %362 = vmatprep.subr.mxu0 0.0
        %363 = vmatpush1.msra.mxu0 %v361
        %364 = vmatprep.subr.mxu0 0.0
        %365 = vmatpush1.msra.mxu0 %v360
        %366 = vmatprep.subr.mxu0 0.0
        %367 = vmatpush1.msra.mxu0 %v359
        %368 = vmatprep.subr.mxu0 0.0
        %369 = vmatpush1.msra.mxu0 %v358
        %370 = vmatprep.subr.mxu0 0.0
        %371 = vmatpush1.msra.mxu0 %v357
        %372 = vmatprep.subr.mxu0 0.0
        %373 = vmatpush1.msra.mxu0 %v356
        %374 = vmatprep.subr.mxu0 0.0
        %375 = vmatpush1.msra.mxu0 %v355
        %376 = vmatprep.subr.mxu0 0.0
        %377 = vmatpush1.msra.mxu0 %v354
        %378 = vmatprep.subr.mxu0 0.0
        %379 = vmatpush1.msra.mxu0 %v353
        %380 = vmatprep.subr.mxu0 0.0
        %381 = vmatpush1.msra.mxu0 %v352
        %382 = vmatprep.subr.mxu0 0.0
        %383 = vmatpush1.msra.mxu0 %v351
        %384 = vmatprep.subr.mxu0 0.0
        %385 = vmatpush1.msra.mxu0 %v350
        %386 = vmatprep.subr.mxu0 0.0
        %387 = vmatpush1.msra.mxu0 %v349
        %388 = vmatprep.subr.mxu0 0.0
        %389 = vmatpush1.msra.mxu0 %v348
        %390 = vmatprep.subr.mxu0 0.0
        %391 = vmatpush1.msra.mxu0 %v347
        %392 = vmatprep.subr.mxu0 0.0
        %393 = vmatpush1.msra.mxu0 %v346
        %394 = vmatprep.subr.mxu0 0.0
        %395 = vmatpush2.msra.mxu0 0.0
        %396 = vmatprep.subr.mxu0 0.0
        %397 = vmatpush2.msra.mxu0 0.0
        %398 = vmatprep.subr.mxu0 0.0
        %399 = vmatpush2.msra.mxu0 0.0
        %400 = vmatprep.subr.mxu0 0.0
        %401 = vmatpush2.msra.mxu0 0.0
        %402 = vmatprep.subr.mxu0 0.0
        %403 = vmatpush2.msra.mxu0 0.0
        %404 = vmatprep.subr.mxu0 0.0
        %405 = vmatpush2.msra.mxu0 0.0
        %406 = vmatprep.subr.mxu0 0.0
        %407 = vmatpush2.msra.mxu0 0.0
        %408 = vmatprep.subr.mxu0 0.0
        %409 = vmatpush2.msra.mxu0 0.0
        %410 = vmatprep.subr.mxu0 0.0
        %411 = vmatpush2.msra.mxu0 0.0
        %412 = vmatprep.subr.mxu0 0.0
        %413 = vmatpush2.msra.mxu0 0.0
        %414 = vmatprep.subr.mxu0 0.0
        %415 = vmatpush2.msra.mxu0 0.0
        %416 = vmatprep.subr.mxu0 0.0
        %417 = vmatpush2.msra.mxu0 0.0
        %418 = vmatprep.subr.mxu0 0.0
        %419 = vmatpush2.msra.mxu0 0.0
        %420 = vmatprep.subr.mxu0 0.0
        %421 = vmatpush2.msra.mxu0 0.0
        %422 = vmatprep.subr.mxu0 0.0
        %423 = vmatpush2.msra.mxu0 0.0
        %424 = vmatprep.subr.mxu0 0.0
        %425 = vmatpush2.msra.mxu0 0.0
        %426 = vmatprep.mubr.f32.mxu0 0.0
        %427 = vmatmul.mubr.f32.gmra.mxu0 %v314
        %v428 = vpop.f32.mrf.mxu0
        %v429 = vadd.f32 0.0, %v428
        %v430 = vpop.f32.mrf.mxu0
        %431 = vmatprep.mubr.f32.mxu0 0.0
        %432 = vmatmul.mubr.f32.gmra.mxu0 %v315
        %v433 = vpop.f32.mrf.mxu0
        %v434 = vadd.f32 0.0, %v433
        %v435 = vpop.f32.mrf.mxu0
        %436 = vmatprep.mubr.f32.mxu0 0.0
        %437 = vmatmul.mubr.f32.gmra.mxu0 %v316
        %v438 = vpop.f32.mrf.mxu0
        %v439 = vadd.f32 0.0, %v438
        %v440 = vpop.f32.mrf.mxu0
        %441 = vmatprep.mubr.f32.mxu0 0.0
        %442 = vmatmul.mubr.f32.gmra.mxu0 %v317
        %v443 = vpop.f32.mrf.mxu0
        %v444 = vadd.f32 0.0, %v443
        %v445 = vpop.f32.mrf.mxu0
        %446 = vmatprep.mubr.f32.mxu0 0.0
        %447 = vmatmul.mubr.f32.gmra.mxu0 %v318
        %v448 = vpop.f32.mrf.mxu0
        %v449 = vadd.f32 0.0, %v448
        %v450 = vpop.f32.mrf.mxu0
        %451 = vmatprep.mubr.f32.mxu0 0.0
        %452 = vmatmul.mubr.f32.gmra.mxu0 %v319
        %v453 = vpop.f32.mrf.mxu0
        %v454 = vadd.f32 0.0, %v453
        %v455 = vpop.f32.mrf.mxu0
        %456 = vmatprep.mubr.f32.mxu0 0.0
        %457 = vmatmul.mubr.f32.gmra.mxu0 %v320
        %v458 = vpop.f32.mrf.mxu0
        %v459 = vadd.f32 0.0, %v458
        %v460 = vpop.f32.mrf.mxu0
        %461 = vmatprep.mubr.f32.mxu0 0.0
        %462 = vmatmul.mubr.f32.gmra.mxu0 %v321
        %v463 = vpop.f32.mrf.mxu0
        %v464 = vadd.f32 0.0, %v463
        %v465 = vpop.f32.mrf.mxu0
        %466 = vmatprep.mubr.f32.mxu0 0.0
        %467 = vmatmul.mubr.f32.gmra.mxu0 %v322
        %v468 = vpop.f32.mrf.mxu0
        %v469 = vadd.f32 0.0, %v468
        %v470 = vpop.f32.mrf.mxu0
        %471 = vmatprep.mubr.f32.mxu0 0.0
        %472 = vmatmul.mubr.f32.gmra.mxu0 %v323
        %v473 = vpop.f32.mrf.mxu0
        %v474 = vadd.f32 0.0, %v473
        %v475 = vpop.f32.mrf.mxu0
        %476 = vmatprep.mubr.f32.mxu0 0.0
        %477 = vmatmul.mubr.f32.gmra.mxu0 %v324
        %v478 = vpop.f32.mrf.mxu0
        %v479 = vadd.f32 0.0, %v478
        %v480 = vpop.f32.mrf.mxu0
        %481 = vmatprep.mubr.f32.mxu0 0.0
        %482 = vmatmul.mubr.f32.gmra.mxu0 %v325
        %v483 = vpop.f32.mrf.mxu0
        %v484 = vadd.f32 0.0, %v483
        %v485 = vpop.f32.mrf.mxu0
        %486 = vmatprep.mubr.f32.mxu0 0.0
        %487 = vmatmul.mubr.f32.gmra.mxu0 %v326
        %v488 = vpop.f32.mrf.mxu0
        %v489 = vadd.f32 0.0, %v488
        %v490 = vpop.f32.mrf.mxu0
        %491 = vmatprep.mubr.f32.mxu0 0.0
        %492 = vmatmul.mubr.f32.gmra.mxu0 %v327
        %v493 = vpop.f32.mrf.mxu0
        %v494 = vadd.f32 0.0, %v493
        %v495 = vpop.f32.mrf.mxu0
        %496 = vmatprep.mubr.f32.mxu0 0.0
        %497 = vmatmul.mubr.f32.gmra.mxu0 %v328
        %v498 = vpop.f32.mrf.mxu0
        %v499 = vadd.f32 0.0, %v498
        %v500 = vpop.f32.mrf.mxu0
        %501 = vmatprep.mubr.f32.mxu0 0.0
        %502 = vmatmul.mubr.f32.gmra.mxu0 %v329
        %v503 = vpop.f32.mrf.mxu0
        %v504 = vadd.f32 0.0, %v503
        %v505 = vpop.f32.mrf.mxu0
        %506 = vmatprep.mubr.f32.mxu0 0.0
        %507 = vmatmul.mubr.f32.gmra.mxu0 %v330
        %v508 = vpop.f32.mrf.mxu0
        %v509 = vadd.f32 0.0, %v508
        %v510 = vpop.f32.mrf.mxu0
        %511 = vmatprep.mubr.f32.mxu0 0.0
        %512 = vmatmul.mubr.f32.gmra.mxu0 %v331
        %v513 = vpop.f32.mrf.mxu0
        %v514 = vadd.f32 0.0, %v513
        %v515 = vpop.f32.mrf.mxu0
        %516 = vmatprep.mubr.f32.mxu0 0.0
        %517 = vmatmul.mubr.f32.gmra.mxu0 %v332
        %v518 = vpop.f32.mrf.mxu0
        %v519 = vadd.f32 0.0, %v518
        %v520 = vpop.f32.mrf.mxu0
        %521 = vmatprep.mubr.f32.mxu0 0.0
        %522 = vmatmul.mubr.f32.gmra.mxu0 %v333
        %v523 = vpop.f32.mrf.mxu0
        %v524 = vadd.f32 0.0, %v523
        %v525 = vpop.f32.mrf.mxu0
        %526 = vmatprep.mubr.f32.mxu0 0.0
        %527 = vmatmul.mubr.f32.gmra.mxu0 %v334
        %v528 = vpop.f32.mrf.mxu0
        %v529 = vadd.f32 0.0, %v528
        %v530 = vpop.f32.mrf.mxu0
        %531 = vmatprep.mubr.f32.mxu0 0.0
        %532 = vmatmul.mubr.f32.gmra.mxu0 %v335
        %v533 = vpop.f32.mrf.mxu0
        %v534 = vadd.f32 0.0, %v533
        %v535 = vpop.f32.mrf.mxu0
        %536 = vmatprep.mubr.f32.mxu0 0.0
        %537 = vmatmul.mubr.f32.gmra.mxu0 %v336
        %v538 = vpop.f32.mrf.mxu0
        %v539 = vadd.f32 0.0, %v538
        %v540 = vpop.f32.mrf.mxu0
        %541 = vmatprep.mubr.f32.mxu0 0.0
        %542 = vmatmul.mubr.f32.gmra.mxu0 %v337
        %v543 = vpop.f32.mrf.mxu0
        %v544 = vadd.f32 0.0, %v543
        %v545 = vpop.f32.mrf.mxu0
        %546 = vmatprep.mubr.f32.mxu0 0.0
        %547 = vmatmul.mubr.f32.gmra.mxu0 %v338
        %v548 = vpop.f32.mrf.mxu0
        %v549 = vadd.f32 0.0, %v548
        %v550 = vpop.f32.mrf.mxu0
        %551 = vmatprep.mubr.f32.mxu0 0.0
        %552 = vmatmul.mubr.f32.gmra.mxu0 %v339
        %v553 = vpop.f32.mrf.mxu0
        %v554 = vadd.f32 0.0, %v553
        %v555 = vpop.f32.mrf.mxu0
        %556 = vmatprep.mubr.f32.mxu0 0.0
        %557 = vmatmul.mubr.f32.gmra.mxu0 %v340
        %v558 = vpop.f32.mrf.mxu0
        %v559 = vadd.f32 0.0, %v558
        %v560 = vpop.f32.mrf.mxu0
        %561 = vmatprep.mubr.f32.mxu0 0.0
        %562 = vmatmul.mubr.f32.gmra.mxu0 %v341
        %v563 = vpop.f32.mrf.mxu0
        %v564 = vadd.f32 0.0, %v563
        %v565 = vpop.f32.mrf.mxu0
        %566 = vmatprep.mubr.f32.mxu0 0.0
        %567 = vmatmul.mubr.f32.gmra.mxu0 %v342
        %v568 = vpop.f32.mrf.mxu0
        %v569 = vadd.f32 0.0, %v568
        %v570 = vpop.f32.mrf.mxu0
        %571 = vmatprep.mubr.f32.mxu0 0.0
        %572 = vmatmul.mubr.f32.gmra.mxu0 %v343
        %v573 = vpop.f32.mrf.mxu0
        %v574 = vadd.f32 0.0, %v573
        %v575 = vpop.f32.mrf.mxu0
        %576 = vmatprep.mubr.f32.mxu0 0.0
        %577 = vmatmul.mubr.f32.gmra.mxu0 %v344
        %v578 = vpop.f32.mrf.mxu0
        %v579 = vadd.f32 0.0, %v578
        %v580 = vpop.f32.mrf.mxu0
        %581 = vmatprep.mubr.f32.mxu0 0.0
        %582 = vmatmul.mubr.f32.gmra.mxu0 %v345
        %v583 = vpop.f32.mrf.mxu0
        %v584 = vadd.f32 0.0, %v583
        %v585 = vpop.f32.mrf.mxu0
        %586 = vdwg.mxu0
        %v587 = vld [vmem:[%s271] sm:$0xff]
        %v588 = vld [vmem:[%s271 + $0x8] sm:$0xff]
        %v589 = vld [vmem:[%s271 + $0x10] sm:$0xff]
        %v590 = vld [vmem:[%s271 + $0x18] sm:$0xff]
        %v591 = vld [vmem:[%s271 + $0x20] sm:$0xff]
        %v592 = vld [vmem:[%s271 + $0x28] sm:$0xff]
        %v593 = vld [vmem:[%s271 + $0x30] sm:$0xff]
        %v594 = vld [vmem:[%s271 + $0x38] sm:$0xff]
        %v595 = vld [vmem:[%s271 + $0x40] sm:$0xff]
        %v596 = vld [vmem:[%s271 + $0x48] sm:$0xff]
        %v597 = vld [vmem:[%s271 + $0x50] sm:$0xff]
        %v598 = vld [vmem:[%s271 + $0x58] sm:$0xff]
        %v599 = vld [vmem:[%s271 + $0x60] sm:$0xff]
        %v600 = vld [vmem:[%s271 + $0x68] sm:$0xff]
        %v601 = vld [vmem:[%s271 + $0x70] sm:$0xff]
        %v602 = vld [vmem:[%s271 + $0x78] sm:$0xff]
        %v603 = vld [vmem:[%s271 + $0x80] sm:$0xff]
        %v604 = vld [vmem:[%s271 + $0x88] sm:$0xff]
        %v605 = vld [vmem:[%s271 + $0x90] sm:$0xff]
        %v606 = vld [vmem:[%s271 + $0x98] sm:$0xff]
        %v607 = vld [vmem:[%s271 + $0xa0] sm:$0xff]
        %v608 = vld [vmem:[%s271 + $0xa8] sm:$0xff]
        %v609 = vld [vmem:[%s271 + $0xb0] sm:$0xff]
        %v610 = vld [vmem:[%s271 + $0xb8] sm:$0xff]
        %v611 = vld [vmem:[%s271 + $0xc0] sm:$0xff]
        %v612 = vld [vmem:[%s271 + $0xc8] sm:$0xff]
        %v613 = vld [vmem:[%s271 + $0xd0] sm:$0xff]
        %v614 = vld [vmem:[%s271 + $0xd8] sm:$0xff]
        %v615 = vld [vmem:[%s271 + $0xe0] sm:$0xff]
        %v616 = vld [vmem:[%s271 + $0xe8] sm:$0xff]
        %v617 = vld [vmem:[%s271 + $0xf0] sm:$0xff]
        %v618 = vld [vmem:[%s271 + $0xf8] sm:$0xff]
        %v619 = vmul.f32 %v429, %v587
        %v620 = vmul.f32 %v434, %v588
        %v621 = vmul.f32 %v439, %v589
        %v622 = vmul.f32 %v444, %v590
        %v623 = vmul.f32 %v449, %v591
        %v624 = vmul.f32 %v454, %v592
        %v625 = vmul.f32 %v459, %v593
        %v626 = vmul.f32 %v464, %v594
        %v627 = vmul.f32 %v469, %v595
        %v628 = vmul.f32 %v474, %v596
        %v629 = vmul.f32 %v479, %v597
        %v630 = vmul.f32 %v484, %v598
        %v631 = vmul.f32 %v489, %v599
        %v632 = vmul.f32 %v494, %v600
        %v633 = vmul.f32 %v499, %v601
        %v634 = vmul.f32 %v504, %v602
        %v635 = vmul.f32 %v509, %v603
        %v636 = vmul.f32 %v514, %v604
        %v637 = vmul.f32 %v519, %v605
        %v638 = vmul.f32 %v524, %v606
        %v639 = vmul.f32 %v529, %v607
        %v640 = vmul.f32 %v534, %v608
        %v641 = vmul.f32 %v539, %v609
        %v642 = vmul.f32 %v544, %v610
        %v643 = vmul.f32 %v549, %v611
        %v644 = vmul.f32 %v554, %v612
        %v645 = vmul.f32 %v559, %v613
        %v646 = vmul.f32 %v564, %v614
        %v647 = vmul.f32 %v569, %v615
        %v648 = vmul.f32 %v574, %v616
        %v649 = vmul.f32 %v579, %v617
        %v650 = vmul.f32 %v584, %v618
        %v651 = vld [vmem:[#allocation9] sm:$0xff]
        %s652 = sld [smem:[#allocation2]]
        %v653 = vstv %s652
        %654 = vmatprep.subr.mxu0 0.0
        %655 = vmatpush1.xpose.msra.mxu0 %v634
        %656 = vmatprep.subr.mxu0 0.0
        %657 = vmatpush1.xpose.msra.mxu0 %v633
        %658 = vmatprep.subr.mxu0 0.0
        %659 = vmatpush1.xpose.msra.mxu0 %v632
        %660 = vmatprep.subr.mxu0 0.0
        %661 = vmatpush1.xpose.msra.mxu0 %v631
        %662 = vmatprep.subr.mxu0 0.0
        %663 = vmatpush1.xpose.msra.mxu0 %v630
        %664 = vmatprep.subr.mxu0 0.0
        %665 = vmatpush1.xpose.msra.mxu0 %v629
        %666 = vmatprep.subr.mxu0 0.0
        %667 = vmatpush1.xpose.msra.mxu0 %v628
        %668 = vmatprep.subr.mxu0 0.0
        %669 = vmatpush1.xpose.msra.mxu0 %v627
        %670 = vmatprep.subr.mxu0 0.0
        %671 = vmatpush1.xpose.msra.mxu0 %v626
        %672 = vmatprep.subr.mxu0 0.0
        %673 = vmatpush1.xpose.msra.mxu0 %v625
        %674 = vmatprep.subr.mxu0 0.0
        %675 = vmatpush1.xpose.msra.mxu0 %v624
        %676 = vmatprep.subr.mxu0 0.0
        %677 = vmatpush1.xpose.msra.mxu0 %v623
        %678 = vmatprep.subr.mxu0 0.0
        %679 = vmatpush1.xpose.msra.mxu0 %v622
        %680 = vmatprep.subr.mxu0 0.0
        %681 = vmatpush1.xpose.msra.mxu0 %v621
        %682 = vmatprep.subr.mxu0 0.0
        %683 = vmatpush1.xpose.msra.mxu0 %v620
        %684 = vmatprep.subr.mxu0 0.0
        %685 = vmatpush1.xpose.msra.mxu0 %v619
        %686 = vmatprep.subr.mxu0 0.0
        %687 = vmatpush2.xpose.msra.mxu0 %v650
        %688 = vmatprep.subr.mxu0 0.0
        %689 = vmatpush2.xpose.msra.mxu0 %v649
        %690 = vmatprep.subr.mxu0 0.0
        %691 = vmatpush2.xpose.msra.mxu0 %v648
        %692 = vmatprep.subr.mxu0 0.0
        %693 = vmatpush2.xpose.msra.mxu0 %v647
        %694 = vmatprep.subr.mxu0 0.0
        %695 = vmatpush2.xpose.msra.mxu0 %v646
        %696 = vmatprep.subr.mxu0 0.0
        %697 = vmatpush2.xpose.msra.mxu0 %v645
        %698 = vmatprep.subr.mxu0 0.0
        %699 = vmatpush2.xpose.msra.mxu0 %v644
        %700 = vmatprep.subr.mxu0 0.0
        %701 = vmatpush2.xpose.msra.mxu0 %v643
        %702 = vmatprep.subr.mxu0 0.0
        %703 = vmatpush2.xpose.msra.mxu0 %v642
        %704 = vmatprep.subr.mxu0 0.0
        %705 = vmatpush2.xpose.msra.mxu0 %v641
        %706 = vmatprep.subr.mxu0 0.0
        %707 = vmatpush2.xpose.msra.mxu0 %v640
        %708 = vmatprep.subr.mxu0 0.0
        %709 = vmatpush2.xpose.msra.mxu0 %v639
        %710 = vmatprep.subr.mxu0 0.0
        %711 = vmatpush2.xpose.msra.mxu0 %v638
        %712 = vmatprep.subr.mxu0 0.0
        %713 = vmatpush2.xpose.msra.mxu0 %v637
        %714 = vmatprep.subr.mxu0 0.0
        %715 = vmatpush2.xpose.msra.mxu0 %v636
        %716 = vmatprep.subr.mxu0 0.0
        %717 = vmatpush2.xpose.msra.mxu0 %v635
        %718 = vmatprep.mubr.f32.mxu0 0.0
        %719 = vmatmul.mubr.f32.gmra.mxu0 %v651
        %v720 = vpop.f32.mrf.mxu0
        %v721 = vadd.f32 %v653, %v720
        %v722 = vpop.f32.mrf.mxu0
        %v723 = vadd.f32 %v653, %v722
        %724 = vdwg.mxu0
        %725 = vst [vmem:[%s310] sm:$0xff] %v721
        %726 = vst [vmem:[%s310 + $0x8] sm:$0xff] %v723
        %s727 = sand.u32 %s150, 1
        %s728 = scalar_lea.sflag [#allocation5], %s727
        %s729 = sand.u32 %s150, 1
        %s730 = smul.addr %s729, 16
        %s731 = scalar_lea.vmem [#allocation11], %s730
        // Predicated region
        $region57: #{tpu_custom_call.1} parent=39 // pred_check
          %p732 = pneg %p160
        $region58: #{tpu_custom_call.1} parent=39 // pred_check_branch
          %734 = sbr.rel (%p732) target = $region60
        $region59: #{tpu_custom_call.1} parent=39 // pred_region
          %s735 = smul.u32 2, %s27
          %s737 = ssub.s32 256, 256
          %738 = vsyncadd %s728, %s737
          %s739 = smul.addr %s735, 128
          %s740 = scalar_lea.hbm %s5, %s739
          %s742 = sshll.u32 %s731, 4
          %s743 = int_to_ptr.vmem [resolvable:$true] %s742
          %745 = dma.vmem_to_hbm [thread:$0]  %s743, 256, %s740, %s728
        $region60: #{tpu_custom_call.1} parent=39 // pred_fallthru
          _
      $region40: #{tpu_custom_call.1} parent=5 // pred_fallthru
        _
      %p746 = scmp.le.s32.totalorder 2, %s22
      // Predicated region
      $region61: #{tpu_custom_call.1} parent=5 // pred_check
        %p747 = pneg %p746
      $region62: #{tpu_custom_call.1} parent=5 // pred_check_branch
        %749 = sbr.rel (%p747) target = $region64
      $region63: #{tpu_custom_call.1} parent=5 // pred_region
        %s750 = ssub.s32 %s22, 2
        // Predicated region
        $region65: #{tpu_custom_call.1} parent=63 // pred_check
          %p751 = pneg %p166
        $region66: #{tpu_custom_call.1} parent=63 // pred_check_branch
          %753 = sbr.rel (%p751) target = $region68
        $region67: #{tpu_custom_call.1} parent=63 // pred_region
          %s754 = sand.u32 %s151, 1
          %s755 = scalar_lea.sflag [#allocation5], %s754
          %s756 = sand.u32 %s151, 1
          %s757 = smul.addr %s756, 16
          %s758 = scalar_lea.vmem [#allocation11], %s757
          %759 = dma.done %s755, 256
        $region68: #{tpu_custom_call.1} parent=63 // pred_fallthru
          _
      $region64: #{tpu_custom_call.1} parent=5 // pred_fallthru
        _
    $region6: #{tpu_custom_call.1} parent=1 // loop_footer
      %s26 = sadd.s32 1, %s22
    $region7: #{tpu_custom_call.1} parent=1 // loop_footer_branch
      %21 = sbr.rel target = $region3
    $region8: #{tpu_custom_call.1} parent=1 // loop_exit
      _
    %760 = vsyncpa [#allocation4], 1
    %s761 = scalar_lea.sflag [#allocation4], 1
    %762 = vsyncpa %s761, 1
    %763 = vsyncpa [#allocation7], 1
    %s764 = scalar_lea.sflag [#allocation7], 1
    %765 = vsyncpa %s764, 1
    %766 = vsyncpa [#allocation10], 1
    %767 = vsyncpa [#allocation5], 1
    %s768 = scalar_lea.sflag [#allocation5], 1
    %769 = vsyncpa %s768, 1

</llo_original>
